<compile_context>
chip_gen: v5e
topology: v5e:2x2
jax: 0.10.0
libtpu: 0.0.40
codegen_flags: <defaults>
</compile_context>

<pallas_src>
import jax
import jax.numpy as jnp
from jax import lax
from jax.experimental import pallas as pl
from jax.experimental.pallas import tpu as pltpu


# ----------------------------- helpers -------------------------------------- #

def _round_up(x, m):
    return ((x + m - 1) // m) * m


def _vmem_limit_bytes():
    """Scoped-VMEM limit: ~100 MiB on 128-MiB chips (v5e/v6e), ~56 MiB on v7x."""
    try:
        cap = pltpu.get_tpu_info().vmem_capacity_bytes
    except Exception:
        cap = 64 << 20  # conservative (v7x-sized) fallback
    return int(min(cap - (8 << 20), 100 << 20))


# ----------------------------- kernels --------------------------------------- #

def qkv_projection_kernel(x_ref, w_ref, qkv_ref):
    """Fused q|k|v projection: single MXU pass over the concatenated weight."""
    qkv_ref[...] = jnp.dot(
        x_ref[...], w_ref[...], preferred_element_type=jnp.float32
    ).astype(qkv_ref.dtype)


def make_flash_attention_kernel(s_valid, tk, needs_mask):
    """Online-softmax attention over kv tiles. q is already scaled by 1/sqrt(D)."""

    def kernel(q_ref, k_ref, v_ref, o_ref, m_sc, l_sc, acc_sc):
        kv = pl.program_id(1)

        @pl.when(kv == 0)
        def _():
            m_sc[...] = jnp.full_like(m_sc, -jnp.inf)
            l_sc[...] = jnp.zeros_like(l_sc)
            acc_sc[...] = jnp.zeros_like(acc_sc)

        # s = q @ k.T, contracting last dims directly (no in-kernel transpose).
        s = lax.dot_general(
            q_ref[...], k_ref[...],
            dimension_numbers=(((1,), (1,)), ((), ())),
            preferred_element_type=jnp.float32)                 # f32 [tq, tk]

        if needs_mask:
            # Mask padded KV columns; the first kv tile always holds valid
            # columns, so m_new stays finite and exp(-inf - m_new) == 0.
            col = lax.broadcasted_iota(jnp.int32, s.shape, 1) + kv * tk
            s = jnp.where(col < s_valid, s, -jnp.inf)

        m_prev = m_sc[...]
        m_new = jnp.maximum(m_prev, jnp.max(s, axis=-1, keepdims=True))
        alpha = jnp.exp(m_prev - m_new)
        p = jnp.exp(s - m_new)                                  # unnormalized probs

        l_sc[...] = alpha * l_sc[...] + jnp.sum(p, axis=-1, keepdims=True)
        acc_sc[...] = alpha * acc_sc[...] + jnp.dot(
            p.astype(v_ref.dtype), v_ref[...],                  # bf16 probs -> MXU
            preferred_element_type=jnp.float32)
        m_sc[...] = m_new

        @pl.when(kv == pl.num_programs(1) - 1)
        def _():
            # Deferred normalization on the [tq, Dp] accumulator (EUP reciprocal).
            o_ref[...] = (acc_sc[...] * pl.reciprocal(l_sc[...], approx=True)
                          ).astype(o_ref.dtype)

    return kernel


# ----------------------------- wrapper --------------------------------------- #

def self_attention(x, wq, wk, wv):
    S, D = x.shape
    scale = 1.0 / (float(D) ** 0.5)          # PyTorch scales by sqrt(k.size(col_dim))
    Dp = max(128, _round_up(D, 128))         # lane-dense feature dim

    limit = _vmem_limit_bytes()
    budget = int(limit * 0.6)                # leave room for pipeline overheads

    # q tile sets arithmetic intensity: bigger on 128-MiB parts, 512 cap on v7x.
    tq_cap = 1024 if budget >= (48 << 20) else 512
    tq = min(tq_cap, _round_up(S, 128))
    Sp = _round_up(S, tq)                    # padded sequence length (tile multiple)

    def attn_vmem_bytes(tq_, tk_):
        q_blk = 2 * tq_ * Dp * 2             # double-buffered bf16 q block
        kv_blk = 2 * 2 * tk_ * Dp * 2        # k + v, double-buffered bf16
        o_blk = 2 * tq_ * Dp * 2             # bf16 output block
        scratch = tq_ * Dp * 4 + 2 * tq_ * 4
        work = 2 * tq_ * tk_ * 4             # score/prob working tiles
        return q_blk + kv_blk + o_blk + scratch + work

    # If even a minimal kv tile blows the budget (huge D), shrink the q tile.
    while attn_vmem_bytes(tq, 128) > budget and tq > 128:
        tq //= 2

    # Keep K/V fully VMEM-resident when they fit -> no HBM re-streaming per q tile.
    if attn_vmem_bytes(tq, Sp) <= budget:
        tk = Sp
    else:
        tk = 128
        for cand in (1024, 512, 256):
            if Sp % cand == 0 and attn_vmem_bytes(tq, cand) <= budget:
                tk = cand
                break

    # With resident K/V, guarantee >= 2 q tiles so both v7x TensorCores get work.
    if tk == Sp and Sp // tq < 2 and tq >= 256:
        tq //= 2

    needs_mask = Sp != S

    # One-time wrapper-side prep: pad, transpose, fold scale into W_q, cast to bf16.
    x_p = jnp.pad(x.astype(jnp.float32),
                  ((0, Sp - S), (0, Dp - D))).astype(jnp.bfloat16)

    def prep_weight(w, s=1.0):
        wt = w.T.astype(jnp.float32) * s                        # [D, D]
        return jnp.pad(wt, ((0, Dp - D), (0, Dp - D))).astype(jnp.bfloat16)

    w_fused = jnp.concatenate(
        [prep_weight(wq, scale), prep_weight(wk), prep_weight(wv)], axis=1)  # [Dp, 3Dp]

    # ---- fused QKV projection (row tiles x output-column tiles) ---- #
    ts = tq
    tn = 3 * Dp
    if Dp * tn * 2 * 2 > budget // 2:        # fused weight block too big -> tile cols
        tn = 128
        for cand in (1024, 512, 256):
            if (3 * Dp) % cand == 0 and Dp * cand * 2 * 2 <= budget // 2:
                tn = cand
                break

    proj_cost = pl.CostEstimate(
        flops=int(2 * Sp * Dp * 3 * Dp),
        transcendentals=0,
        bytes_accessed=int((Sp * Dp + Dp * 3 * Dp + Sp * 3 * Dp) * 2))

    qkv = pl.pallas_call(
        qkv_projection_kernel,
        out_shape=jax.ShapeDtypeStruct((Sp, 3 * Dp), jnp.bfloat16),
        grid_spec=pltpu.PrefetchScalarGridSpec(
            num_scalar_prefetch=0,
            grid=(Sp // ts, (3 * Dp) // tn),
            in_specs=[
                pl.BlockSpec((ts, Dp), lambda i, j: (i, 0)),
                pl.BlockSpec((Dp, tn), lambda i, j: (0, j)),
            ],
            out_specs=pl.BlockSpec((ts, tn), lambda i, j: (i, j)),
        ),
        compiler_params=pltpu.CompilerParams(
            dimension_semantics=("parallel", "parallel"),
            vmem_limit_bytes=limit),
        cost_estimate=proj_cost,
    )(x_p, w_fused)

    # ---- flash-style attention: grid (q_tiles, kv_tiles), kv reduction last ---- #
    kv_reread = 1 if tk == Sp else max(1, Sp // tq)
    attn_cost = pl.CostEstimate(
        flops=int(4 * Sp * Sp * Dp),
        transcendentals=int(Sp * Sp),
        bytes_accessed=int(Sp * Dp * 2 + 2 * Sp * Dp * 2 * kv_reread + Sp * Dp * 2))

    flash_kernel = make_flash_attention_kernel(S, tk, needs_mask)

    out_p = pl.pallas_call(
        flash_kernel,
        out_shape=jax.ShapeDtypeStruct((Sp, Dp), jnp.bfloat16),
        grid_spec=pltpu.PrefetchScalarGridSpec(
            num_scalar_prefetch=0,
            grid=(Sp // tq, Sp // tk),
            in_specs=[
                # q / k / v are column slices of the fused qkv array.
                pl.BlockSpec((tq, Dp), lambda i, j: (i, 0)),
                pl.BlockSpec((tk, Dp), lambda i, j: (j, 1)),
                pl.BlockSpec((tk, Dp), lambda i, j: (j, 2)),
            ],
            out_specs=pl.BlockSpec((tq, Dp), lambda i, j: (i, 0)),
            scratch_shapes=[
                pltpu.VMEM((tq, 1), jnp.float32),    # running max
                pltpu.VMEM((tq, 1), jnp.float32),    # running denom
                pltpu.VMEM((tq, Dp), jnp.float32),   # output accumulator
            ],
        ),
        compiler_params=pltpu.CompilerParams(
            dimension_semantics=("parallel", "arbitrary"),
            vmem_limit_bytes=limit),
        cost_estimate=attn_cost,
    )(qkv, qkv, qkv)

    return out_p[:S, :D].astype(x.dtype)      # drop padding, f32 API dtype


def reference(x, wq, wk, wv):
    q = x @ wq.T
    k = x @ wk.T
    v = x @ wv.T
    sims = q @ k.T
    scaled = sims / jnp.sqrt(jnp.float32(k.shape[1]))
    attn = jax.nn.softmax(scaled, axis=1)
    return attn @ v


if __name__ == "__main__":
    key = jax.random.PRNGKey(0)

    # Small shapes consistent with the module default (d_model=2), seq len 8.
    S, D = 8, 2
    kx, kq, kk, kv = jax.random.split(key, 4)
    x = jax.random.normal(kx, (S, D), dtype=jnp.float32)
    bound = 1.0 / (D ** 0.5)
    wq = jax.random.uniform(kq, (D, D), jnp.float32, -bound, bound)
    wk = jax.random.uniform(kk, (D, D), jnp.float32, -bound, bound)
    wv = jax.random.uniform(kv, (D, D), jnp.float32, -bound, bound)

    out = jax.block_until_ready(self_attention(x, wq, wk, wv))
    ref = reference(x, wq, wk, wv)
    assert out.shape == (S, D)
    # bf16 matmul operands/output + approx reciprocal -> looser tolerance than f32.
    assert jnp.allclose(out, ref, atol=5e-2, rtol=5e-2), (out, ref)

    # Second check: exercises sequence padding + masking with multiple q tiles.
    S2, D2 = 200, 64
    kx2, kq2, kk2, kv2 = jax.random.split(jax.random.PRNGKey(1), 4)
    x2 = jax.random.normal(kx2, (S2, D2), dtype=jnp.float32)
    b2 = 1.0 / (D2 ** 0.5)
    wq2 = jax.random.uniform(kq2, (D2, D2), jnp.float32, -b2, b2)
    wk2 = jax.random.uniform(kk2, (D2, D2), jnp.float32, -b2, b2)
    wv2 = jax.random.uniform(kv2, (D2, D2), jnp.float32, -b2, b2)

    out2 = jax.block_until_ready(self_attention(x2, wq2, wk2, wv2))
    ref2 = reference(x2, wq2, wk2, wv2)
    assert out2.shape == (S2, D2)
    assert jnp.allclose(out2, ref2, atol=5e-2, rtol=5e-2)

    print("KERNEL_OK")
</pallas_src>

<mosaic_0001>
module attributes {stable_mosaic.version = 11 : i64} {
  func.func @qkv_projection_kernel(%arg0: i32, %arg1: i32, %arg2: memref<128x128xbf16, #tpu.memory_space<vmem>>, %arg3: memref<128x384xbf16, #tpu.memory_space<vmem>>, %arg4: memref<128x384xbf16, #tpu.memory_space<vmem>>) attributes {dimension_semantics = [#tpu.dimension_semantics<parallel>, #tpu.dimension_semantics<parallel>], iteration_bounds = array<i64: 1, 1>, scalar_prefetch = 0 : i64, scratch_operands = 0 : i64, tpu.core_type = #tpu.core_type<tc>, window_params = [{transform_indices = @transform_0, window_bounds = array<i64: 128, 128>}, {transform_indices = @transform_1, window_bounds = array<i64: 128, 384>}, {transform_indices = @transform_2, window_bounds = array<i64: 128, 384>}]} {
    %c0 = arith.constant 0 : index
    %c0_0 = arith.constant 0 : index
    %0 = vector.load %arg2[%c0, %c0_0] : memref<128x128xbf16, #tpu.memory_space<vmem>>, vector<128x128xbf16>
    %c0_1 = arith.constant 0 : index
    %c0_2 = arith.constant 0 : index
    %1 = vector.load %arg3[%c0_1, %c0_2] : memref<128x384xbf16, #tpu.memory_space<vmem>>, vector<128x384xbf16>
    %cst = arith.constant dense<0.000000e+00> : vector<128x384xf32>
    %2 = tpu.matmul %0, %1, %cst {dimension_numbers = #tpu.dot_dimension_numbers<[1], [0], [0], [1], [0, 0, 1, 1], [], []>} : vector<128x128xbf16>, vector<128x384xbf16>, vector<128x384xf32> -> vector<128x384xf32>
    %3 = arith.truncf %2 : vector<128x384xf32> to vector<128x384xbf16>
    %c0_3 = arith.constant 0 : index
    %c0_4 = arith.constant 0 : index
    %4 = vector.load %arg4[%c0_3, %c0_4] : memref<128x384xbf16, #tpu.memory_space<vmem>>, vector<128x384xbf16>
    tpu.vector_store %arg4[%c0_3, %c0_4], %3 {strides = array<i32>} : memref<128x384xbf16, #tpu.memory_space<vmem>>, vector<128x384xbf16>,
    return
  }
  func.func @transform_0(%arg0: i32, %arg1: i32) -> (i32, i32) {
    %c0_i32 = arith.constant 0 : i32
    %c0_i32_0 = arith.constant 0 : i32
    return %arg0, %c0_i32 : i32, i32
  }
  func.func @transform_1(%arg0: i32, %arg1: i32) -> (i32, i32) {
    %c0_i32 = arith.constant 0 : i32
    %c0_i32_0 = arith.constant 0 : i32
    return %c0_i32, %arg1 : i32, i32
  }
  func.func @transform_2(%arg0: i32, %arg1: i32) -> (i32, i32) {
    %c0_i32 = arith.constant 0 : i32
    return %arg0, %arg1 : i32, i32
  }
}

</mosaic_0001>

<llo_original>
// kernel: tpu_custom_call.1
$region0: #{tpu_custom_call.1}
  #allocation0 [shape = 'u32[]', space=smem, size = 0x4, offset = 0x4, fixed_abs, tag = 'smem constant byte address 0x4 - core index']
  #allocation1 [shape = 'u32[72,128]{1,0:T(1,128)}', space=vmem, size = 0x9000, scoped, tag = 'internal scratch']
  %s0 = inlined_call_operand.hbm [shape: bf16[128,128], index: 0, kind: input, shape index: {}]
  %s1 = inlined_call_operand.hbm [shape: bf16[128,384], index: 1, kind: input, shape index: {}]
  %s2 = inlined_call_operand.hbm [shape: bf16[128,384], index: 2, kind: output, shape index: {}]
  %s3 = sld [smem:[#allocation0]]
  $region26: #{tpu_custom_call.1} parent=0
    _
  %s5 = ssub.s32 1, %s3
  %s6 = scalar_select 0, %s5, %s3
  $region1: #{tpu_custom_call.1} parent=0
    #allocation2 [shape = 'u8[32768]{0}', space=vmem, size = 0x8000, scoped, tag = 'input window, operand 0, single buffered']
    #allocation3 [shape = 's32[1]{0}', space=sflag, size = 0x4, scoped, tag = 'scoped memory for tpu_custom_call.1']
    #allocation4 [shape = 's32[1]{0}', space=sflag, size = 0x4, scoped, tag = 'scoped memory for tpu_custom_call.1']
    #allocation5 [shape = 'u8[98304]{0}', space=vmem, size = 0x18000, scoped, tag = 'input window, operand 1, single buffered']
    #allocation6 [shape = 's32[1]{0}', space=sflag, size = 0x4, scoped, tag = 'scoped memory for tpu_custom_call.1']
    #allocation7 [shape = 'u8[98304]{0}', space=vmem, size = 0x18000, scoped, tag = 'output window, operand 0, single buffered']
    %7 = vsyncpa [#allocation3], 0
    %8 = vsyncpa [#allocation6], 0
    %9 = vsyncpa [#allocation4], 0
    // Predicated region
    $region2: #{tpu_custom_call.1} parent=1 // pred_check
      _
    $region3: #{tpu_custom_call.1} parent=1 // pred_check_branch
      %11 = sbr.rel (0) target = $region5
    $region4: #{tpu_custom_call.1} parent=1 // pred_region
      %13 = vsyncadd [#allocation3], 0
      %s14 = sshll.u32 %s0, 4
      %s15 = int_to_ptr.hbm [resolvable:$true] %s14
      %s16 = sshll.u32 [#allocation2], 4
      %s17 = int_to_ptr.vmem [resolvable:$true] %s16
      %22 = dma.hbm_to_vmem [thread:$0]  %s15, 1024, %s17, [#allocation3], 64, 64, 4
    $region5: #{tpu_custom_call.1} parent=1 // pred_fallthru
      _
    // Predicated region
    $region6: #{tpu_custom_call.1} parent=1 // pred_check
      _
    $region7: #{tpu_custom_call.1} parent=1 // pred_check_branch
      %24 = sbr.rel (0) target = $region9
    $region8: #{tpu_custom_call.1} parent=1 // pred_region
      %26 = vsyncadd [#allocation6], 0
      %s27 = sshll.u32 %s1, 4
      %s28 = int_to_ptr.hbm [resolvable:$true] %s27
      %s29 = sshll.u32 [#allocation5], 4
      %s30 = int_to_ptr.vmem [resolvable:$true] %s29
      %35 = dma.hbm_to_vmem [thread:$0]  %s28, 3072, %s30, [#allocation6], 192, 192, 12
    $region9: #{tpu_custom_call.1} parent=1 // pred_fallthru
      _
    // Predicated region
    $region10: #{tpu_custom_call.1} parent=1 // pred_check
      _
    $region11: #{tpu_custom_call.1} parent=1 // pred_check_branch
      %37 = sbr.rel (0) target = $region13
    $region12: #{tpu_custom_call.1} parent=1 // pred_region
      %39 = dma.done [#allocation3], 1024
    $region13: #{tpu_custom_call.1} parent=1 // pred_fallthru
      _
    // Predicated region
    $region14: #{tpu_custom_call.1} parent=1 // pred_check
      _
    $region15: #{tpu_custom_call.1} parent=1 // pred_check_branch
      %41 = sbr.rel (0) target = $region17
    $region16: #{tpu_custom_call.1} parent=1 // pred_region
      %43 = dma.done [#allocation6], 3072
    $region17: #{tpu_custom_call.1} parent=1 // pred_fallthru
      _
    %v44 = vld [vmem:[#allocation2] sm:$0xf]
    %v45 = vld [vmem:[#allocation2 + $0x4] sm:$0xf]
    %v46 = vld [vmem:[#allocation2 + $0x8] sm:$0xf]
    %v47 = vld [vmem:[#allocation2 + $0xc] sm:$0xf]
    %v48 = vld [vmem:[#allocation2 + $0x10] sm:$0xf]
    %v49 = vld [vmem:[#allocation2 + $0x14] sm:$0xf]
    %v50 = vld [vmem:[#allocation2 + $0x18] sm:$0xf]
    %v51 = vld [vmem:[#allocation2 + $0x1c] sm:$0xf]
    %v52 = vld [vmem:[#allocation2 + $0x20] sm:$0xf]
    %v53 = vld [vmem:[#allocation2 + $0x24] sm:$0xf]
    %v54 = vld [vmem:[#allocation2 + $0x28] sm:$0xf]
    %v55 = vld [vmem:[#allocation2 + $0x2c] sm:$0xf]
    %v56 = vld [vmem:[#allocation2 + $0x30] sm:$0xf]
    %v57 = vld [vmem:[#allocation2 + $0x34] sm:$0xf]
    %v58 = vld [vmem:[#allocation2 + $0x38] sm:$0xf]
    %v59 = vld [vmem:[#allocation2 + $0x3c] sm:$0xf]
    %v60 = vld [vmem:[#allocation5] sm:$0xff]
    %v61 = vld [vmem:[#allocation5 + $0x8] sm:$0xf]
    %v62 = vld [vmem:[#allocation5 + $0xc] sm:$0xff]
    %v63 = vld [vmem:[#allocation5 + $0x14] sm:$0xf]
    %v64 = vld [vmem:[#allocation5 + $0x18] sm:$0xff]
    %v65 = vld [vmem:[#allocation5 + $0x20] sm:$0xf]
    %v66 = vld [vmem:[#allocation5 + $0x24] sm:$0xff]
    %v67 = vld [vmem:[#allocation5 + $0x2c] sm:$0xf]
    %v68 = vld [vmem:[#allocation5 + $0x30] sm:$0xff]
    %v69 = vld [vmem:[#allocation5 + $0x38] sm:$0xf]
    %v70 = vld [vmem:[#allocation5 + $0x3c] sm:$0xff]
    %v71 = vld [vmem:[#allocation5 + $0x44] sm:$0xf]
    %v72 = vld [vmem:[#allocation5 + $0x48] sm:$0xff]
    %v73 = vld [vmem:[#allocation5 + $0x50] sm:$0xf]
    %v74 = vld [vmem:[#allocation5 + $0x54] sm:$0xff]
    %v75 = vld [vmem:[#allocation5 + $0x5c] sm:$0xf]
    %v76 = vld [vmem:[#allocation5 + $0x60] sm:$0xff]
    %v77 = vld [vmem:[#allocation5 + $0x68] sm:$0xf]
    %v78 = vld [vmem:[#allocation5 + $0x6c] sm:$0xff]
    %v79 = vld [vmem:[#allocation5 + $0x74] sm:$0xf]
    %v80 = vld [vmem:[#allocation5 + $0x78] sm:$0xff]
    %v81 = vld [vmem:[#allocation5 + $0x80] sm:$0xf]
    %v82 = vld [vmem:[#allocation5 + $0x84] sm:$0xff]
    %v83 = vld [vmem:[#allocation5 + $0x8c] sm:$0xf]
    %v84 = vld [vmem:[#allocation5 + $0x90] sm:$0xff]
    %v85 = vld [vmem:[#allocation5 + $0x98] sm:$0xf]
    %v86 = vld [vmem:[#allocation5 + $0x9c] sm:$0xff]
    %v87 = vld [vmem:[#allocation5 + $0xa4] sm:$0xf]
    %v88 = vld [vmem:[#allocation5 + $0xa8] sm:$0xff]
    %v89 = vld [vmem:[#allocation5 + $0xb0] sm:$0xf]
    %v90 = vld [vmem:[#allocation5 + $0xb4] sm:$0xff]
    %v91 = vld [vmem:[#allocation5 + $0xbc] sm:$0xf]
    %v108 = vunpack.c.l.b16 %v44
    %v109 = vunpack.c.l.b16 %v45
    %v110 = vunpack.c.l.b16 %v46
    %v111 = vunpack.c.l.b16 %v47
    %v112 = vunpack.c.l.b16 %v48
    %v113 = vunpack.c.l.b16 %v49
    %v114 = vunpack.c.l.b16 %v50
    %v115 = vunpack.c.l.b16 %v51
    %v116 = vunpack.c.l.b16 %v52
    %v117 = vunpack.c.l.b16 %v53
    %v118 = vunpack.c.l.b16 %v54
    %v119 = vunpack.c.l.b16 %v55
    %v120 = vunpack.c.l.b16 %v56
    %v121 = vunpack.c.l.b16 %v57
    %v122 = vunpack.c.l.b16 %v58
    %v123 = vunpack.c.l.b16 %v59
    %v124 = vpack.c.b16 %v109, %v108
    %v125 = vpack.c.b16 %v111, %v110
    %v126 = vpack.c.b16 %v113, %v112
    %v127 = vpack.c.b16 %v115, %v114
    %v128 = vpack.c.b16 %v117, %v116
    %v129 = vpack.c.b16 %v119, %v118
    %v130 = vpack.c.b16 %v121, %v120
    %v131 = vpack.c.b16 %v123, %v122
    %v172 = vunpack.c.l.b16 %v60
    %v173 = vunpack.c.h.b16 %v60
    %v174 = vunpack.c.l.b16 %v61
    %v175 = vunpack.c.l.b16 %v62
    %v176 = vunpack.c.h.b16 %v62
    %v177 = vunpack.c.l.b16 %v63
    %v178 = vunpack.c.l.b16 %v64
    %v179 = vunpack.c.h.b16 %v64
    %v180 = vunpack.c.l.b16 %v65
    %v181 = vunpack.c.l.b16 %v66
    %v182 = vunpack.c.h.b16 %v66
    %v183 = vunpack.c.l.b16 %v67
    %v184 = vunpack.c.l.b16 %v68
    %v185 = vunpack.c.h.b16 %v68
    %v186 = vunpack.c.l.b16 %v69
    %v187 = vunpack.c.l.b16 %v70
    %v188 = vunpack.c.h.b16 %v70
    %v189 = vunpack.c.l.b16 %v71
    %v190 = vunpack.c.l.b16 %v72
    %v191 = vunpack.c.h.b16 %v72
    %v192 = vunpack.c.l.b16 %v73
    %v193 = vunpack.c.l.b16 %v74
    %v194 = vunpack.c.h.b16 %v74
    %v195 = vunpack.c.l.b16 %v75
    %v196 = vunpack.c.l.b16 %v76
    %v197 = vunpack.c.h.b16 %v76
    %v198 = vunpack.c.l.b16 %v77
    %v199 = vunpack.c.l.b16 %v78
    %v200 = vunpack.c.h.b16 %v78
    %v201 = vunpack.c.l.b16 %v79
    %v202 = vunpack.c.l.b16 %v80
    %v203 = vunpack.c.h.b16 %v80
    %v204 = vunpack.c.l.b16 %v81
    %v205 = vunpack.c.l.b16 %v82
    %v206 = vunpack.c.h.b16 %v82
    %v207 = vunpack.c.l.b16 %v83
    %v208 = vunpack.c.l.b16 %v84
    %v209 = vunpack.c.h.b16 %v84
    %v210 = vunpack.c.l.b16 %v85
    %v211 = vunpack.c.l.b16 %v86
    %v212 = vunpack.c.h.b16 %v86
    %v213 = vunpack.c.l.b16 %v87
    %v214 = vunpack.c.l.b16 %v88
    %v215 = vunpack.c.h.b16 %v88
    %v216 = vunpack.c.l.b16 %v89
    %v217 = vunpack.c.l.b16 %v90
    %v218 = vunpack.c.h.b16 %v90
    %v219 = vunpack.c.l.b16 %v91
    %v220 = vpack.c.b16 %v175, %v172
    %v221 = vpack.c.b16 %v176, %v173
    %v222 = vpack.c.b16 %v177, %v174
    %v223 = vpack.c.b16 %v181, %v178
    %v224 = vpack.c.b16 %v182, %v179
    %v225 = vpack.c.b16 %v183, %v180
    %v226 = vpack.c.b16 %v187, %v184
    %v227 = vpack.c.b16 %v188, %v185
    %v228 = vpack.c.b16 %v189, %v186
    %v229 = vpack.c.b16 %v193, %v190
    %v230 = vpack.c.b16 %v194, %v191
    %v231 = vpack.c.b16 %v195, %v192
    %v232 = vpack.c.b16 %v199, %v196
    %v233 = vpack.c.b16 %v200, %v197
    %v234 = vpack.c.b16 %v201, %v198
    %v235 = vpack.c.b16 %v205, %v202
    %v236 = vpack.c.b16 %v206, %v203
    %v237 = vpack.c.b16 %v207, %v204
    %v238 = vpack.c.b16 %v211, %v208
    %v239 = vpack.c.b16 %v212, %v209
    %v240 = vpack.c.b16 %v213, %v210
    %v241 = vpack.c.b16 %v217, %v214
    %v242 = vpack.c.b16 %v218, %v215
    %v243 = vpack.c.b16 %v219, %v216
    %268 = vmatpush.bf16.msra.mxu0 %v241
    %269 = vmatpush.bf16.msra.mxu0 %v238
    %270 = vmatpush.bf16.msra.mxu0 %v235
    %271 = vmatpush.bf16.msra.mxu0 %v232
    %272 = vmatpush.bf16.msra.mxu0 %v229
    %273 = vmatpush.bf16.msra.mxu0 %v226
    %274 = vmatpush.bf16.msra.mxu0 %v223
    %275 = vmatpush.bf16.msra.mxu0 %v220
    %276 = vmatmul.bf16.gmra.mxu0 %v124
    %v277 = vpop.f32.mrf.mxu0
    %v278 = vadd.f32 0.0, %v277
    %v279 = vpop.f32.mrf.mxu0
    %v280 = vadd.f32 0.0, %v279
    %281 = vmatmul.bf16.gmra.mxu0 %v125
    %v282 = vpop.f32.mrf.mxu0
    %v283 = vadd.f32 0.0, %v282
    %v284 = vpop.f32.mrf.mxu0
    %v285 = vadd.f32 0.0, %v284
    %286 = vmatmul.bf16.gmra.mxu0 %v126
    %v287 = vpop.f32.mrf.mxu0
    %v288 = vadd.f32 0.0, %v287
    %v289 = vpop.f32.mrf.mxu0
    %v290 = vadd.f32 0.0, %v289
    %291 = vmatmul.bf16.gmra.mxu0 %v127
    %v292 = vpop.f32.mrf.mxu0
    %v293 = vadd.f32 0.0, %v292
    %v294 = vpop.f32.mrf.mxu0
    %v295 = vadd.f32 0.0, %v294
    %296 = vmatmul.bf16.gmra.mxu0 %v128
    %v297 = vpop.f32.mrf.mxu0
    %v298 = vadd.f32 0.0, %v297
    %v299 = vpop.f32.mrf.mxu0
    %v300 = vadd.f32 0.0, %v299
    %301 = vmatmul.bf16.gmra.mxu0 %v129
    %v302 = vpop.f32.mrf.mxu0
    %v303 = vadd.f32 0.0, %v302
    %v304 = vpop.f32.mrf.mxu0
    %v305 = vadd.f32 0.0, %v304
    %306 = vmatmul.bf16.gmra.mxu0 %v130
    %v307 = vpop.f32.mrf.mxu0
    %v308 = vadd.f32 0.0, %v307
    %v309 = vpop.f32.mrf.mxu0
    %v310 = vadd.f32 0.0, %v309
    %311 = vmatmul.bf16.gmra.mxu0 %v131
    %v312 = vpop.f32.mrf.mxu0
    %v313 = vadd.f32 0.0, %v312
    %v314 = vpop.f32.mrf.mxu0
    %v315 = vadd.f32 0.0, %v314
    %316 = vdwg.mxu0
    %317 = vmatpush.bf16.msra.mxu0 %v242
    %318 = vmatpush.bf16.msra.mxu0 %v239
    %319 = vmatpush.bf16.msra.mxu0 %v236
    %320 = vmatpush.bf16.msra.mxu0 %v233
    %321 = vmatpush.bf16.msra.mxu0 %v230
    %322 = vmatpush.bf16.msra.mxu0 %v227
    %323 = vmatpush.bf16.msra.mxu0 %v224
    %324 = vmatpush.bf16.msra.mxu0 %v221
    %325 = vmatmul.bf16.gmra.mxu0 %v124
    %v326 = vpop.f32.mrf.mxu0
    %v327 = vadd.f32 0.0, %v326
    %v328 = vpop.f32.mrf.mxu0
    %v329 = vadd.f32 0.0, %v328
    %330 = vmatmul.bf16.gmra.mxu0 %v125
    %v331 = vpop.f32.mrf.mxu0
    %v332 = vadd.f32 0.0, %v331
    %v333 = vpop.f32.mrf.mxu0
    %v334 = vadd.f32 0.0, %v333
    %335 = vmatmul.bf16.gmra.mxu0 %v126
    %v336 = vpop.f32.mrf.mxu0
    %v337 = vadd.f32 0.0, %v336
    %v338 = vpop.f32.mrf.mxu0
    %v339 = vadd.f32 0.0, %v338
    %340 = vmatmul.bf16.gmra.mxu0 %v127
    %v341 = vpop.f32.mrf.mxu0
    %v342 = vadd.f32 0.0, %v341
    %v343 = vpop.f32.mrf.mxu0
    %v344 = vadd.f32 0.0, %v343
    %345 = vmatmul.bf16.gmra.mxu0 %v128
    %v346 = vpop.f32.mrf.mxu0
    %v347 = vadd.f32 0.0, %v346
    %v348 = vpop.f32.mrf.mxu0
    %v349 = vadd.f32 0.0, %v348
    %350 = vmatmul.bf16.gmra.mxu0 %v129
    %v351 = vpop.f32.mrf.mxu0
    %v352 = vadd.f32 0.0, %v351
    %v353 = vpop.f32.mrf.mxu0
    %v354 = vadd.f32 0.0, %v353
    %355 = vmatmul.bf16.gmra.mxu0 %v130
    %v356 = vpop.f32.mrf.mxu0
    %v357 = vadd.f32 0.0, %v356
    %v358 = vpop.f32.mrf.mxu0
    %v359 = vadd.f32 0.0, %v358
    %360 = vmatmul.bf16.gmra.mxu0 %v131
    %v361 = vpop.f32.mrf.mxu0
    %v362 = vadd.f32 0.0, %v361
    %v363 = vpop.f32.mrf.mxu0
    %v364 = vadd.f32 0.0, %v363
    %365 = vdwg.mxu0
    %366 = vmatpush.bf16.msra.mxu0 %v243
    %367 = vmatpush.bf16.msra.mxu0 %v240
    %368 = vmatpush.bf16.msra.mxu0 %v237
    %369 = vmatpush.bf16.msra.mxu0 %v234
    %370 = vmatpush.bf16.msra.mxu0 %v231
    %371 = vmatpush.bf16.msra.mxu0 %v228
    %372 = vmatpush.bf16.msra.mxu0 %v225
    %373 = vmatpush.bf16.msra.mxu0 %v222
    %374 = vmatmul.bf16.gmra.mxu0 %v124
    %v375 = vpop.f32.mrf.mxu0
    %v376 = vadd.f32 0.0, %v375
    %v377 = vpop.f32.mrf.mxu0
    %v378 = vadd.f32 0.0, %v377
    %379 = vmatmul.bf16.gmra.mxu0 %v125
    %v380 = vpop.f32.mrf.mxu0
    %v381 = vadd.f32 0.0, %v380
    %v382 = vpop.f32.mrf.mxu0
    %v383 = vadd.f32 0.0, %v382
    %384 = vmatmul.bf16.gmra.mxu0 %v126
    %v385 = vpop.f32.mrf.mxu0
    %v386 = vadd.f32 0.0, %v385
    %v387 = vpop.f32.mrf.mxu0
    %v388 = vadd.f32 0.0, %v387
    %389 = vmatmul.bf16.gmra.mxu0 %v127
    %v390 = vpop.f32.mrf.mxu0
    %v391 = vadd.f32 0.0, %v390
    %v392 = vpop.f32.mrf.mxu0
    %v393 = vadd.f32 0.0, %v392
    %394 = vmatmul.bf16.gmra.mxu0 %v128
    %v395 = vpop.f32.mrf.mxu0
    %v396 = vadd.f32 0.0, %v395
    %v397 = vpop.f32.mrf.mxu0
    %v398 = vadd.f32 0.0, %v397
    %399 = vmatmul.bf16.gmra.mxu0 %v129
    %v400 = vpop.f32.mrf.mxu0
    %v401 = vadd.f32 0.0, %v400
    %v402 = vpop.f32.mrf.mxu0
    %v403 = vadd.f32 0.0, %v402
    %404 = vmatmul.bf16.gmra.mxu0 %v130
    %v405 = vpop.f32.mrf.mxu0
    %v406 = vadd.f32 0.0, %v405
    %v407 = vpop.f32.mrf.mxu0
    %v408 = vadd.f32 0.0, %v407
    %409 = vmatmul.bf16.gmra.mxu0 %v131
    %v410 = vpop.f32.mrf.mxu0
    %v411 = vadd.f32 0.0, %v410
    %v412 = vpop.f32.mrf.mxu0
    %v413 = vadd.f32 0.0, %v412
    %414 = vdwg.mxu0
    %v415 = vpack.c.bf16 %v327, %v278
    %v416 = vpack.c.bf16 %v376, %v376
    %v417 = vpack.c.bf16 %v329, %v280
    %v418 = vpack.c.bf16 %v378, %v378
    %v419 = vpack.c.bf16 %v332, %v283
    %v420 = vpack.c.bf16 %v381, %v381
    %v421 = vpack.c.bf16 %v334, %v285
    %v422 = vpack.c.bf16 %v383, %v383
    %v423 = vpack.c.bf16 %v337, %v288
    %v424 = vpack.c.bf16 %v386, %v386
    %v425 = vpack.c.bf16 %v339, %v290
    %v426 = vpack.c.bf16 %v388, %v388
    %v427 = vpack.c.bf16 %v342, %v293
    %v428 = vpack.c.bf16 %v391, %v391
    %v429 = vpack.c.bf16 %v344, %v295
    %v430 = vpack.c.bf16 %v393, %v393
    %v431 = vpack.c.bf16 %v347, %v298
    %v432 = vpack.c.bf16 %v396, %v396
    %v433 = vpack.c.bf16 %v349, %v300
    %v434 = vpack.c.bf16 %v398, %v398
    %v435 = vpack.c.bf16 %v352, %v303
    %v436 = vpack.c.bf16 %v401, %v401
    %v437 = vpack.c.bf16 %v354, %v305
    %v438 = vpack.c.bf16 %v403, %v403
    %v439 = vpack.c.bf16 %v357, %v308
    %v440 = vpack.c.bf16 %v406, %v406
    %v441 = vpack.c.bf16 %v359, %v310
    %v442 = vpack.c.bf16 %v408, %v408
    %v443 = vpack.c.bf16 %v362, %v313
    %v444 = vpack.c.bf16 %v411, %v411
    %v445 = vpack.c.bf16 %v364, %v315
    %v446 = vpack.c.bf16 %v413, %v413
    %447 = vst [vmem:[#allocation7] sm:$0xff] %v415
    %448 = vst [vmem:[#allocation7 + $0x8] sm:$0xf] %v416
    %449 = vst [vmem:[#allocation7 + $0xc] sm:$0xff] %v417
    %450 = vst [vmem:[#allocation7 + $0x14] sm:$0xf] %v418
    %451 = vst [vmem:[#allocation7 + $0x18] sm:$0xff] %v419
    %452 = vst [vmem:[#allocation7 + $0x20] sm:$0xf] %v420
    %453 = vst [vmem:[#allocation7 + $0x24] sm:$0xff] %v421
    %454 = vst [vmem:[#allocation7 + $0x2c] sm:$0xf] %v422
    %455 = vst [vmem:[#allocation7 + $0x30] sm:$0xff] %v423
    %456 = vst [vmem:[#allocation7 + $0x38] sm:$0xf] %v424
    %457 = vst [vmem:[#allocation7 + $0x3c] sm:$0xff] %v425
    %458 = vst [vmem:[#allocation7 + $0x44] sm:$0xf] %v426
    %459 = vst [vmem:[#allocation7 + $0x48] sm:$0xff] %v427
    %460 = vst [vmem:[#allocation7 + $0x50] sm:$0xf] %v428
    %461 = vst [vmem:[#allocation7 + $0x54] sm:$0xff] %v429
    %462 = vst [vmem:[#allocation7 + $0x5c] sm:$0xf] %v430
    %463 = vst [vmem:[#allocation7 + $0x60] sm:$0xff] %v431
    %464 = vst [vmem:[#allocation7 + $0x68] sm:$0xf] %v432
    %465 = vst [vmem:[#allocation7 + $0x6c] sm:$0xff] %v433
    %466 = vst [vmem:[#allocation7 + $0x74] sm:$0xf] %v434
    %467 = vst [vmem:[#allocation7 + $0x78] sm:$0xff] %v435
    %468 = vst [vmem:[#allocation7 + $0x80] sm:$0xf] %v436
    %469 = vst [vmem:[#allocation7 + $0x84] sm:$0xff] %v437
    %470 = vst [vmem:[#allocation7 + $0x8c] sm:$0xf] %v438
    %471 = vst [vmem:[#allocation7 + $0x90] sm:$0xff] %v439
    %472 = vst [vmem:[#allocation7 + $0x98] sm:$0xf] %v440
    %473 = vst [vmem:[#allocation7 + $0x9c] sm:$0xff] %v441
    %474 = vst [vmem:[#allocation7 + $0xa4] sm:$0xf] %v442
    %475 = vst [vmem:[#allocation7 + $0xa8] sm:$0xff] %v443
    %476 = vst [vmem:[#allocation7 + $0xb0] sm:$0xf] %v444
    %477 = vst [vmem:[#allocation7 + $0xb4] sm:$0xff] %v445
    %478 = vst [vmem:[#allocation7 + $0xbc] sm:$0xf] %v446
    // Predicated region
    $region18: #{tpu_custom_call.1} parent=1 // pred_check
      _
    $region19: #{tpu_custom_call.1} parent=1 // pred_check_branch
      %480 = sbr.rel (0) target = $region21
    $region20: #{tpu_custom_call.1} parent=1 // pred_region
      %482 = vsyncadd [#allocation4], 0
      %s483 = sshll.u32 [#allocation7], 4
      %s484 = int_to_ptr.vmem [resolvable:$true] %s483
      %s485 = sshll.u32 %s2, 4
      %s486 = int_to_ptr.hbm [resolvable:$true] %s485
      %491 = dma.vmem_to_hbm [thread:$0]  %s484, 3072, %s486, [#allocation4], 192, 192, 12
    $region21: #{tpu_custom_call.1} parent=1 // pred_fallthru
      _
    // Predicated region
    $region22: #{tpu_custom_call.1} parent=1 // pred_check
      _
    $region23: #{tpu_custom_call.1} parent=1 // pred_check_branch
      %493 = sbr.rel (0) target = $region25
    $region24: #{tpu_custom_call.1} parent=1 // pred_region
      %495 = dma.done [#allocation4], 3072
    $region25: #{tpu_custom_call.1} parent=1 // pred_fallthru
      _
    %496 = vsyncpa [#allocation3], 1
    %497 = vsyncpa [#allocation6], 1
    %498 = vsyncpa [#allocation4], 1

</llo_original>
